<compile_context>
chip_gen: v6e
topology: v6e:2x2x1
jax: 0.10.0
libtpu: 0.0.40
codegen_flags: <defaults>
</compile_context>

<pallas_src>
import functools

import jax
import jax.numpy as jnp
from jax.experimental import pallas as pl
from jax.experimental.pallas import tpu as pltpu


def _round_up(x: int, m: int) -> int:
    return ((x + m - 1) // m) * m


def _sublane(dtype) -> int:
    # native sublane packing: 8 rows for 4-byte, 16 for 2-byte, 32 for 1-byte
    return {4: 8, 2: 16, 1: 32}.get(jnp.dtype(dtype).itemsize, 8)


def _vmem_capacity_bytes() -> int:
    try:
        cap = int(pltpu.get_tpu_info().vmem_capacity_bytes)
        if cap > 0:
            return cap
    except Exception:
        pass
    return 64 * 1024 * 1024  # conservative default (v7x class)


def _highway_kernel(s_ref, v_ref, w_ref, b_ref, o_ref, *, d_f: int, version: str):
    s = s_ref[...]                       # (tile_r, d_f), native dtype
    v = v_ref[...]
    # Concatenate along K in VMEM -> one well-shaped MXU pass:
    #   (tile_r, 2*d_f) @ (2*d_f, n_gates*d_f), f32 accumulation.
    x = jnp.concatenate([s, v], axis=-1)
    pre = jnp.dot(x, w_ref[...], preferred_element_type=jnp.float32)
    pre = pre + b_ref[...]               # bias already f32, broadcast over rows

    h = jnp.tanh(pre[:, :d_f])
    g = jax.nn.sigmoid(pre[:, d_f:2 * d_f])
    s32 = s.astype(jnp.float32)
    v32 = v.astype(jnp.float32)
    if version == "v1":
        z = g * h + 0.5 * (1.0 - g) * (s32 + v32)
    else:  # "v2"
        b = jax.nn.sigmoid(pre[:, 2 * d_f:3 * d_f])
        z = g * h + (1.0 - g) * (b * s32 + (1.0 - b) * v32)
    o_ref[...] = z.astype(o_ref.dtype)


def pack_highway_weights(Wh, bh, Wg, bg, Wb=None, *, version: str = "v1",
                         weight_dtype=None):
    """Pack torch nn.Linear weights ONCE (pre-transposed, gate-fused).

    Torch layout: W*.shape == (d_f, 2*d_f), b*.shape == (d_f,).
    Returns (w_all, b_all) with w_all: (2*d_f, n_gates*d_f), b_all: (1, n_gates*d_f) f32.
    Cache the result; do not re-pack on every forward call.
    """
    Wh = jnp.asarray(Wh); Wg = jnp.asarray(Wg)
    bh = jnp.asarray(bh); bg = jnp.asarray(bg)
    d_f = Wh.shape[0]
    assert Wh.shape == (d_f, 2 * d_f) and Wg.shape == (d_f, 2 * d_f)

    mats = [Wh.T, Wg.T]
    biases = [bh, bg]
    if version == "v2":
        assert Wb is not None, "version='v2' requires Wb"
        Wb = jnp.asarray(Wb)
        assert Wb.shape == (d_f, 2 * d_f)
        mats.append(Wb.T)
        biases.append(jnp.zeros((d_f,), dtype=bh.dtype))  # Wb has no bias
    elif version != "v1":
        raise ValueError(f"unknown version {version!r}")

    w_all = jnp.concatenate(mats, axis=1)                     # (2*d_f, n_g*d_f)
    b_all = jnp.concatenate(biases).reshape(1, -1).astype(jnp.float32)
    if weight_dtype is not None:
        w_all = w_all.astype(weight_dtype)                    # e.g. bf16 weights
    return w_all, b_all


def mm_highway_fusion(s_emb, v_emb, w_all, b_all, *,
                      version: str = "v1", tile_rows: int = 1024):
    """Forward pass of MMHighwayFusionOp with pre-packed weights."""
    assert s_emb.shape == v_emb.shape, "scalar/vector embeddings must match"
    if version not in ("v1", "v2"):
        raise ValueError(f"unknown version {version!r}")
    *lead, d_f = s_emb.shape
    n_g = 2 if version == "v1" else 3
    assert w_all.shape == (2 * d_f, n_g * d_f), (w_all.shape, d_f, n_g)
    assert b_all.shape == (1, n_g * d_f)

    rows = 1
    for dim in lead:
        rows *= dim
    s2d = s_emb.reshape(rows, d_f)
    v2d = v_emb.reshape(rows, d_f)

    act_b = jnp.dtype(s_emb.dtype).itemsize
    w_b = jnp.dtype(w_all.dtype).itemsize
    sub = _sublane(s_emb.dtype)

    # ---- row-tile sizing ----------------------------------------------------
    tile_r = min(int(tile_rows), _round_up(rows, sub))
    # keep >=~4 grid steps so both v7x TensorCores get work and the BlockSpec
    # double-buffer pipeline actually overlaps DMA with compute
    tile_r = min(tile_r, _round_up(pl.cdiv(rows, 4), sub))
    tile_r = max(sub, _round_up(tile_r, sub))

    # resident weights+bias are double-buffered by the BlockSpec pipeline
    wt_bytes = 2 * (2 * d_f * n_g * d_f * w_b + n_g * d_f * 4)

    def step_bytes(tr: int) -> int:
        io = 3 * 2 * tr * d_f * act_b                         # s, v, out (x2 buffers)
        tmp = tr * (2 * d_f * act_b + (n_g + 4) * d_f * 4)    # [s;v] concat + f32 temps
        return io + tmp + wt_bytes

    vmem_cap = _vmem_capacity_bytes()
    budget = max(32 * 1024 * 1024, (vmem_cap * 3) // 4)       # ~48 MiB v7x, ~96 MiB v5e/v6e
    while tile_r > sub and step_bytes(tile_r) > budget:
        tile_r = max(sub, _round_up(tile_r // 2, sub))

    vmem_limit = int(min(vmem_cap,
                         max(step_bytes(tile_r) + 4 * 1024 * 1024,
                             32 * 1024 * 1024)))

    grid = (pl.cdiv(rows, tile_r),)
    row_spec = pl.BlockSpec((tile_r, d_f), lambda i: (i, 0))
    w_spec = pl.BlockSpec((2 * d_f, n_g * d_f), lambda i: (0, 0))   # resident
    b_spec = pl.BlockSpec((1, n_g * d_f), lambda i: (0, 0))         # resident

    cost = pl.CostEstimate(
        flops=2 * rows * (2 * d_f) * (n_g * d_f) + 12 * rows * d_f,
        transcendentals=rows * d_f * n_g,
        bytes_accessed=3 * rows * d_f * act_b
        + 2 * d_f * n_g * d_f * w_b + n_g * d_f * 4,
    )

    kernel = functools.partial(_highway_kernel, d_f=d_f, version=version)

    out2d = pl.pallas_call(
        kernel,
        out_shape=jax.ShapeDtypeStruct((rows, d_f), s_emb.dtype),
        grid_spec=pltpu.PrefetchScalarGridSpec(
            num_scalar_prefetch=0,
            grid=grid,
            in_specs=[row_spec, row_spec, w_spec, b_spec],
            out_specs=pl.BlockSpec((tile_r, d_f), lambda i: (i, 0)),
        ),
        compiler_params=pltpu.CompilerParams(
            dimension_semantics=("parallel",),    # megacore sharding on v7x
            vmem_limit_bytes=vmem_limit,
        ),
        cost_estimate=cost,
    )(s2d, v2d, w_all, b_all)

    return out2d.reshape(*lead, d_f)


if __name__ == "__main__":
    key = jax.random.PRNGKey(0)
    d_f = 32                       # d_s_emb == d_v_emb == d_f
    B, N = 2, 8

    ks = jax.random.split(key, 8)
    s = jax.random.normal(ks[0], (B, N, d_f), dtype=jnp.float32)
    v = jax.random.normal(ks[1], (B, N, d_f), dtype=jnp.float32)

    lim = float(1.0 / (2.0 * d_f) ** 0.5)
    Wh = jax.random.uniform(ks[2], (d_f, 2 * d_f), jnp.float32, -lim, lim)
    bh = jax.random.uniform(ks[3], (d_f,), jnp.float32, -lim, lim)
    Wg = jax.random.uniform(ks[4], (d_f, 2 * d_f), jnp.float32, -lim, lim)
    bg = jax.random.uniform(ks[5], (d_f,), jnp.float32, -lim, lim)
    Wb = jax.random.uniform(ks[6], (d_f, 2 * d_f), jnp.float32, -lim, lim)

    def ref(s_, v_, version):
        x = jnp.concatenate([s_, v_], axis=-1)
        h = jnp.tanh(x @ Wh.T + bh)
        g = jax.nn.sigmoid(x @ Wg.T + bg)
        if version == "v1":
            return g * h + 0.5 * (1.0 - g) * (s_ + v_)
        b = jax.nn.sigmoid(x @ Wb.T)
        return g * h + (1.0 - g) * (b * s_ + (1.0 - b) * v_)

    # pack once per configuration (outside the per-call path)
    w1, b1 = pack_highway_weights(Wh, bh, Wg, bg, version="v1")
    w2, b2 = pack_highway_weights(Wh, bh, Wg, bg, Wb, version="v2")

    # Tolerance covers TPU default-precision matmul (bf16 passes with f32 acc);
    # structural errors (wrong gate/bias/blend) are O(0.1+) and still caught.
    TOL = dict(rtol=1e-2, atol=1e-2)

    # v1
    out1 = jax.block_until_ready(mm_highway_fusion(s, v, w1, b1, version="v1"))
    assert out1.shape == (B, N, d_f), out1.shape
    assert jnp.allclose(out1, ref(s, v, "v1"), **TOL)

    # v2
    out2 = jax.block_until_ready(mm_highway_fusion(s, v, w2, b2, version="v2"))
    assert out2.shape == (B, N, d_f), out2.shape
    assert jnp.allclose(out2, ref(s, v, "v2"), **TOL)

    # ragged row count (rows=15, tile=8) exercising the masked last block
    s_r = jax.random.normal(ks[7], (3, 5, d_f), dtype=jnp.float32)
    v_r = jax.random.normal(ks[0], (3, 5, d_f), dtype=jnp.float32)
    out3 = jax.block_until_ready(
        mm_highway_fusion(s_r, v_r, w1, b1, version="v1", tile_rows=8))
    assert out3.shape == (3, 5, d_f), out3.shape
    assert jnp.allclose(out3, ref(s_r, v_r, "v1"), **TOL)

    # bf16 path: native-dtype MXU inputs, f32 accumulation, bf16 output
    w1_bf, b1_bf = pack_highway_weights(Wh, bh, Wg, bg, version="v1",
                                        weight_dtype=jnp.bfloat16)
    out4 = jax.block_until_ready(
        mm_highway_fusion(s.astype(jnp.bfloat16), v.astype(jnp.bfloat16),
                          w1_bf, b1_bf, version="v1"))
    assert out4.shape == (B, N, d_f), out4.shape
    assert out4.dtype == jnp.bfloat16
    assert jnp.allclose(out4.astype(jnp.float32), ref(s, v, "v1"),
                        rtol=1e-1, atol=1e-1)

    print("KERNEL_OK")
</pallas_src>

<mosaic_0001>
module attributes {stable_mosaic.version = 11 : i64} {
  func.func @_highway_kernel(%arg0: i32, %arg1: memref<8x32xf32, #tpu.memory_space<vmem>>, %arg2: memref<8x32xf32, #tpu.memory_space<vmem>>, %arg3: memref<64x64xf32, #tpu.memory_space<vmem>>, %arg4: memref<1x64xf32, #tpu.memory_space<vmem>>, %arg5: memref<8x32xf32, #tpu.memory_space<vmem>>) attributes {dimension_semantics = [#tpu.dimension_semantics<parallel>], iteration_bounds = array<i64: 2>, scalar_prefetch = 0 : i64, scratch_operands = 0 : i64, tpu.core_type = #tpu.core_type<tc>, window_params = [{transform_indices = @transform_0, window_bounds = array<i64: 8, 32>}, {transform_indices = @transform_1, window_bounds = array<i64: 8, 32>}, {pipeline_mode = #tpu.pipeline_mode<synchronous>, transform_indices = @transform_2, window_bounds = array<i64: 64, 64>}, {pipeline_mode = #tpu.pipeline_mode<synchronous>, transform_indices = @transform_3, window_bounds = array<i64: 1, 64>}, {transform_indices = @transform_4, window_bounds = array<i64: 8, 32>}]} {
    %c0 = arith.constant 0 : index
    %c0_0 = arith.constant 0 : index
    %0 = vector.load %arg1[%c0, %c0_0] : memref<8x32xf32, #tpu.memory_space<vmem>>, vector<8x32xf32>
    %c0_1 = arith.constant 0 : index
    %c0_2 = arith.constant 0 : index
    %1 = vector.load %arg2[%c0_1, %c0_2] : memref<8x32xf32, #tpu.memory_space<vmem>>, vector<8x32xf32>
    %2 = tpu.concatenate %0, %1 in 1 : vector<8x32xf32>, vector<8x32xf32> -> vector<8x64xf32>
    %c0_3 = arith.constant 0 : index
    %c0_4 = arith.constant 0 : index
    %3 = vector.load %arg3[%c0_3, %c0_4] : memref<64x64xf32, #tpu.memory_space<vmem>>, vector<64x64xf32>
    %cst = arith.constant dense<0.000000e+00> : vector<8x64xf32>
    %4 = tpu.matmul %2, %3, %cst {dimension_numbers = #tpu.dot_dimension_numbers<[1], [0], [0], [1], [0, 0, 1, 1], [], []>} : vector<8x64xf32>, vector<64x64xf32>, vector<8x64xf32> -> vector<8x64xf32>
    %c0_5 = arith.constant 0 : index
    %c0_6 = arith.constant 0 : index
    %5 = vector.load %arg4[%c0_5, %c0_6] : memref<1x64xf32, #tpu.memory_space<vmem>>, vector<1x64xf32>
    %6 = vector.broadcast %5 : vector<1x64xf32> to vector<8x64xf32>
    %7 = arith.addf %4, %6 : vector<8x64xf32>
    %8 = vector.extract_strided_slice %7 {offsets = [0, 0], sizes = [8, 32], strides = [1, 1]} : vector<8x64xf32> to vector<8x32xf32>
    %9 = math.tanh %8 : vector<8x32xf32>
    %10 = vector.extract_strided_slice %7 {offsets = [0, 32], sizes = [8, 32], strides = [1, 1]} : vector<8x64xf32> to vector<8x32xf32>
    %11 = arith.negf %10 : vector<8x32xf32>
    %12 = math.exp %11 : vector<8x32xf32>
    %cst_7 = arith.constant 1.000000e+00 : f32
    %13 = vector.broadcast %cst_7 : f32 to vector<8x32xf32>
    %14 = arith.addf %13, %12 : vector<8x32xf32>
    %15 = arith.divf %13, %14 : vector<8x32xf32>
    %16 = arith.mulf %15, %9 : vector<8x32xf32>
    %cst_8 = arith.constant 1.000000e+00 : f32
    %17 = vector.broadcast %cst_8 : f32 to vector<8x32xf32>
    %18 = arith.subf %17, %15 : vector<8x32xf32>
    %cst_9 = arith.constant 5.000000e-01 : f32
    %19 = vector.broadcast %cst_9 : f32 to vector<8x32xf32>
    %20 = arith.mulf %19, %18 : vector<8x32xf32>
    %21 = arith.addf %0, %1 : vector<8x32xf32>
    %22 = arith.mulf %20, %21 : vector<8x32xf32>
    %23 = arith.addf %16, %22 : vector<8x32xf32>
    %c0_10 = arith.constant 0 : index
    %c0_11 = arith.constant 0 : index
    %24 = vector.load %arg5[%c0_10, %c0_11] : memref<8x32xf32, #tpu.memory_space<vmem>>, vector<8x32xf32>
    tpu.vector_store %arg5[%c0_10, %c0_11], %23 {strides = array<i32>} : memref<8x32xf32, #tpu.memory_space<vmem>>, vector<8x32xf32>,
    return
  }
  func.func @transform_0(%arg0: i32) -> (i32, i32) {
    %c0_i32 = arith.constant 0 : i32
    %c0_i32_0 = arith.constant 0 : i32
    return %arg0, %c0_i32 : i32, i32
  }
  func.func @transform_1(%arg0: i32) -> (i32, i32) {
    %c0_i32 = arith.constant 0 : i32
    %c0_i32_0 = arith.constant 0 : i32
    return %arg0, %c0_i32 : i32, i32
  }
  func.func @transform_2(%arg0: i32) -> (i32, i32) {
    %c0_i32 = arith.constant 0 : i32
    %c0_i32_0 = arith.constant 0 : i32
    %c0_i32_1 = arith.constant 0 : i32
    return %c0_i32, %c0_i32_0 : i32, i32
  }
  func.func @transform_3(%arg0: i32) -> (i32, i32) {
    %c0_i32 = arith.constant 0 : i32
    %c0_i32_0 = arith.constant 0 : i32
    %c0_i32_1 = arith.constant 0 : i32
    return %c0_i32, %c0_i32_0 : i32, i32
  }
  func.func @transform_4(%arg0: i32) -> (i32, i32) {
    %c0_i32 = arith.constant 0 : i32
    %c0_i32_0 = arith.constant 0 : i32
    return %arg0, %c0_i32 : i32, i32
  }
}

</mosaic_0001>

<llo_original>
// kernel: tpu_custom_call.1
$region0: #{tpu_custom_call.1}
  #allocation0 [shape = 'u32[]', space=smem, size = 0x4, offset = 0x4, fixed_abs, tag = 'smem constant byte address 0x4 - core index']
  #allocation1 [shape = 'u32[144,128]{1,0:T(1,128)}', space=vmem, size = 0x12000, scoped, tag = 'internal scratch']
  %s0 = inlined_call_operand.hbm [shape: f32[16,32], index: 0, kind: input, shape index: {}]
  %s1 = inlined_call_operand.hbm [shape: f32[16,32], index: 1, kind: input, shape index: {}]
  %s2 = inlined_call_operand.hbm [shape: f32[64,64], index: 2, kind: input, shape index: {}]
  %s3 = inlined_call_operand.vmem [shape: f32[1,64], index: 3, kind: input, shape index: {}]
  %s4 = inlined_call_operand.hbm [shape: f32[16,32], index: 4, kind: output, shape index: {}]
  %s5 = sld [smem:[#allocation0]]
  $region61: #{tpu_custom_call.1} parent=0
    _
  %s7 = ssub.s32 1, %s5
  %s8 = scalar_select 0, %s7, %s5
  $region1: #{tpu_custom_call.1} parent=0
    #allocation2 [shape = 'u8[8192]{0}', space=vmem, size = 0x2000, scoped, tag = 'input window, operand 0']
    #allocation3 [shape = 's32[2]{0}', space=sflag, size = 0x8, scoped, tag = 'scoped memory for tpu_custom_call.1']
    #allocation4 [shape = 's32[2]{0}', space=sflag, size = 0x8, scoped, tag = 'scoped memory for tpu_custom_call.1']
    #allocation5 [shape = 'u8[8192]{0}', space=vmem, size = 0x2000, scoped, tag = 'input window, operand 1']
    #allocation6 [shape = 's32[2]{0}', space=sflag, size = 0x8, scoped, tag = 'scoped memory for tpu_custom_call.1']
    #allocation7 [shape = 'u8[32768]{0}', space=vmem, size = 0x8000, scoped, tag = 'input window, operand 2, single buffered']
    #allocation8 [shape = 'u8[8192]{0}', space=vmem, size = 0x2000, scoped, tag = 'output window, operand 0']
    %9 = vsyncpa [#allocation3], 0
    %s10 = scalar_lea.sflag [#allocation3], 1
    %11 = vsyncpa %s10, 0
    %12 = vsyncpa [#allocation6], 0
    %s13 = scalar_lea.sflag [#allocation6], 1
    %14 = vsyncpa %s13, 0
    %15 = vsyncpa [#allocation4], 0
    %s16 = scalar_lea.sflag [#allocation4], 1
    %17 = vsyncpa %s16, 0
    loop: start=0, step=1, limit=4
    $region2: #{tpu_custom_call.1} parent=1 // loop_pre_header
      _
    $region3: #{tpu_custom_call.1} parent=1 // loop_header
      %s19 = sphi 0, %s23
      %p20 = scmp.ge.s32.totalorder %s19, 4
      %s29 = sphi 0, %s31
      %s32 = sphi 0, %s29
      %s33 = sphi 0, %s32
      %s49 = sphi 0, %s33
      %s55 = sphi 0, %s57
      %s58 = sphi 0, %s55
      %s59 = sphi 0, %s58
      %s75 = sphi 0, %s59
      %s79 = sphi 0, %s79
      %s81 = sphi 0, %s79
      %s82 = sphi 0, %s81
      %s96 = sphi 0, %s82
      %s100 = sphi 0, %s100
      %s102 = sphi 0, %s100
      %s103 = sphi 0, %s102
      %s117 = sphi 0, %s103
      %s123 = sphi 0, %s125
      %s126 = sphi 0, %s123
      %s127 = sphi 0, %s126
      %s143 = sphi 0, %s127
    $region4: #{tpu_custom_call.1} parent=1 // loop_header_branch
      %22 = sbr.rel (%p20) target = $region8
    $region5: #{tpu_custom_call.1} parent=1 // loop_body
      %s24 = ssub.s32 %s19, 1
      %s25 = ssub.s32 %s19, 2
      %s26 = sadd.s32 %s19, 1
      %s27 = ssub.s32 %s19, %s26
      %p28 = scmp.eq.s32.totalorder %s27, 0
      %s30 = sadd.s32 %s29, 1
      %s31 = scalar_select %p28, %s29, %s30
      %p34 = pneg %p28
      %p35 = scmp.eq.s32.totalorder %s19, 1
      %p36 = por %p34, %p35
      %p37 = scmp.ne.s32.totalorder %s29, %s32
      %p38 = scmp.eq.s32.totalorder %s19, 0
      %p39 = por %p37, %p38
      %p40 = scmp.ne.s32.totalorder %s29, %s32
      %p41 = scmp.eq.s32.totalorder %s24, 1
      %p42 = por %p40, %p41
      %p43 = scmp.ne.s32.totalorder %s32, %s33
      %p44 = scmp.eq.s32.totalorder %s24, 0
      %p45 = por %p43, %p44
      %p46 = scmp.ne.s32.totalorder %s32, %s33
      %p47 = scmp.eq.s32.totalorder %s25, 1
      %p48 = por %p46, %p47
      %p50 = scmp.ne.s32.totalorder %s33, %s49
      %p51 = scmp.eq.s32.totalorder %s25, 0
      %p52 = por %p50, %p51
      %s53 = ssub.s32 %s19, %s26
      %p54 = scmp.eq.s32.totalorder %s53, 0
      %s56 = sadd.s32 %s55, 1
      %s57 = scalar_select %p54, %s55, %s56
      %p60 = pneg %p54
      %p61 = scmp.eq.s32.totalorder %s19, 1
      %p62 = por %p60, %p61
      %p63 = scmp.ne.s32.totalorder %s55, %s58
      %p64 = scmp.eq.s32.totalorder %s19, 0
      %p65 = por %p63, %p64
      %p66 = scmp.ne.s32.totalorder %s55, %s58
      %p67 = scmp.eq.s32.totalorder %s24, 1
      %p68 = por %p66, %p67
      %p69 = scmp.ne.s32.totalorder %s58, %s59
      %p70 = scmp.eq.s32.totalorder %s24, 0
      %p71 = por %p69, %p70
      %p72 = scmp.ne.s32.totalorder %s58, %s59
      %p73 = scmp.eq.s32.totalorder %s25, 1
      %p74 = por %p72, %p73
      %p76 = scmp.ne.s32.totalorder %s59, %s75
      %p77 = scmp.eq.s32.totalorder %s25, 0
      %p78 = por %p76, %p77
      %s80 = sadd.s32 %s79, 1
      %p83 = scmp.eq.s32.totalorder %s19, 1
      %p84 = scmp.ne.s32.totalorder %s79, %s81
      %p85 = scmp.eq.s32.totalorder %s19, 0
      %p86 = por %p84, %p85
      %p87 = scmp.ne.s32.totalorder %s79, %s81
      %p88 = scmp.eq.s32.totalorder %s24, 1
      %p89 = por %p87, %p88
      %p90 = scmp.ne.s32.totalorder %s81, %s82
      %p91 = scmp.eq.s32.totalorder %s24, 0
      %p92 = por %p90, %p91
      %p93 = scmp.ne.s32.totalorder %s81, %s82
      %p94 = scmp.eq.s32.totalorder %s25, 1
      %p95 = por %p93, %p94
      %p97 = scmp.ne.s32.totalorder %s82, %s96
      %p98 = scmp.eq.s32.totalorder %s25, 0
      %p99 = por %p97, %p98
      %s101 = sadd.s32 %s100, 1
      %p104 = scmp.eq.s32.totalorder %s19, 1
      %p105 = scmp.ne.s32.totalorder %s100, %s102
      %p106 = scmp.eq.s32.totalorder %s19, 0
      %p107 = por %p105, %p106
      %p108 = scmp.ne.s32.totalorder %s100, %s102
      %p109 = scmp.eq.s32.totalorder %s24, 1
      %p110 = por %p108, %p109
      %p111 = scmp.ne.s32.totalorder %s102, %s103
      %p112 = scmp.eq.s32.totalorder %s24, 0
      %p113 = por %p111, %p112
      %p114 = scmp.ne.s32.totalorder %s102, %s103
      %p115 = scmp.eq.s32.totalorder %s25, 1
      %p116 = por %p114, %p115
      %p118 = scmp.ne.s32.totalorder %s103, %s117
      %p119 = scmp.eq.s32.totalorder %s25, 0
      %p120 = por %p118, %p119
      %s121 = ssub.s32 %s19, %s26
      %p122 = scmp.eq.s32.totalorder %s121, 0
      %s124 = sadd.s32 %s123, 1
      %s125 = scalar_select %p122, %s123, %s124
      %p128 = pneg %p122
      %p129 = scmp.eq.s32.totalorder %s19, 1
      %p130 = por %p128, %p129
      %p131 = scmp.ne.s32.totalorder %s123, %s126
      %p132 = scmp.eq.s32.totalorder %s19, 0
      %p133 = por %p131, %p132
      %p134 = scmp.ne.s32.totalorder %s123, %s126
      %p135 = scmp.eq.s32.totalorder %s24, 1
      %p136 = por %p134, %p135
      %p137 = scmp.ne.s32.totalorder %s126, %s127
      %p138 = scmp.eq.s32.totalorder %s24, 0
      %p139 = por %p137, %p138
      %p140 = scmp.ne.s32.totalorder %s126, %s127
      %p141 = scmp.eq.s32.totalorder %s25, 1
      %p142 = por %p140, %p141
      %p144 = scmp.ne.s32.totalorder %s127, %s143
      %p145 = scmp.eq.s32.totalorder %s25, 0
      %p146 = por %p144, %p145
      %p147 = scmp.le.s32.totalorder 1, %s19
      %p148 = scmp.lt.s32.totalorder %s19, 3
      %p149 = pnand %p147, %p148
      %p150 = pneg %p149
      // Predicated region
      $region9: #{tpu_custom_call.1} parent=5 // pred_check
        _
      $region10: #{tpu_custom_call.1} parent=5 // pred_check_branch
        %152 = sbr.rel (%p149) target = $region12
      $region11: #{tpu_custom_call.1} parent=5 // pred_region
        %s153 = ssub.s32 %s19, 1
        // Predicated region
        $region13: #{tpu_custom_call.1} parent=11 // pred_check
          %p154 = pneg %p92
        $region14: #{tpu_custom_call.1} parent=11 // pred_check_branch
          %156 = sbr.rel (%p154) target = $region16
        $region15: #{tpu_custom_call.1} parent=11 // pred_region
          %s158 = ssub.s32 1024, 1024
          %159 = vsyncadd [#allocation6], %s158
          %s160 = sshll.u32 [#allocation7], 4
          %s161 = int_to_ptr.vmem [resolvable:$true] %s160
          %166 = dma.hbm_to_vmem [thread:$0]  %s2, 1024, %s161, [#allocation6], 128, 128, 8
        $region16: #{tpu_custom_call.1} parent=11 // pred_fallthru
          _
        // Predicated region
        $region17: #{tpu_custom_call.1} parent=11 // pred_check
          %p167 = pneg %p113
        $region18: #{tpu_custom_call.1} parent=11 // pred_check_branch
          %169 = sbr.rel (%p167) target = $region20
        $region19: #{tpu_custom_call.1} parent=11 // pred_region
          _
        $region20: #{tpu_custom_call.1} parent=11 // pred_fallthru
          _
      $region12: #{tpu_custom_call.1} parent=5 // pred_fallthru
        _
      %p170 = scmp.lt.s32.totalorder %s19, 2
      // Predicated region
      $region21: #{tpu_custom_call.1} parent=5 // pred_check
        %p171 = pneg %p170
      $region22: #{tpu_custom_call.1} parent=5 // pred_check_branch
        %173 = sbr.rel (%p171) target = $region24
      $region23: #{tpu_custom_call.1} parent=5 // pred_region
        // Predicated region
        $region25: #{tpu_custom_call.1} parent=23 // pred_check
          %p174 = pneg %p39
        $region26: #{tpu_custom_call.1} parent=23 // pred_check_branch
          %176 = sbr.rel (%p174) target = $region28
        $region27: #{tpu_custom_call.1} parent=23 // pred_region
          %s177 = sand.u32 %s29, 1
          %s178 = scalar_lea.sflag [#allocation3], %s177
          %s179 = sand.u32 %s29, 1
          %s180 = smul.addr %s179, 8
          %s181 = scalar_lea.vmem [#allocation2], %s180
          %s183 = ssub.s32 128, 128
          %184 = vsyncadd %s178, %s183
          %s185 = smul.addr %s19, 128
          %s186 = scalar_lea.hbm %s0, %s185
          %s188 = sshll.u32 %s181, 4
          %s189 = int_to_ptr.vmem [resolvable:$true] %s188
          %191 = dma.hbm_to_vmem [thread:$0]  %s186, 128, %s189, %s178
        $region28: #{tpu_custom_call.1} parent=23 // pred_fallthru
          _
        // Predicated region
        $region29: #{tpu_custom_call.1} parent=23 // pred_check
          %p192 = pneg %p65
        $region30: #{tpu_custom_call.1} parent=23 // pred_check_branch
          %194 = sbr.rel (%p192) target = $region32
        $region31: #{tpu_custom_call.1} parent=23 // pred_region
          %s195 = sand.u32 %s19, 1
          %s196 = scalar_lea.sflag [#allocation6], %s195
          %s197 = sand.u32 %s55, 1
          %s198 = smul.addr %s197, 8
          %s199 = scalar_lea.vmem [#allocation5], %s198
          %s201 = ssub.s32 128, 128
          %202 = vsyncadd %s196, %s201
          %s203 = smul.addr %s19, 128
          %s204 = scalar_lea.hbm %s1, %s203
          %s206 = sshll.u32 %s199, 4
          %s207 = int_to_ptr.vmem [resolvable:$true] %s206
          %209 = dma.hbm_to_vmem [thread:$0]  %s204, 128, %s207, %s196
        $region32: #{tpu_custom_call.1} parent=23 // pred_fallthru
          _
      $region24: #{tpu_custom_call.1} parent=5 // pred_fallthru
        _
      %p210 = scmp.le.s32.totalorder 1, %s19
      %p211 = scmp.lt.s32.totalorder %s19, 3
      %p212 = pnand %p210, %p211
      %p213 = pneg %p212
      // Predicated region
      $region33: #{tpu_custom_call.1} parent=5 // pred_check
        _
      $region34: #{tpu_custom_call.1} parent=5 // pred_check_branch
        %215 = sbr.rel (%p212) target = $region36
      $region35: #{tpu_custom_call.1} parent=5 // pred_region
        %s216 = ssub.s32 %s19, 1
        %s217 = sand.u32 %s32, 1
        %s218 = scalar_lea.sflag [#allocation3], %s217
        %s219 = sand.u32 %s32, 1
        %s220 = smul.addr %s219, 8
        %s221 = scalar_lea.vmem [#allocation2], %s220
        // Predicated region
        $region37: #{tpu_custom_call.1} parent=35 // pred_check
          %p222 = pneg %p45
        $region38: #{tpu_custom_call.1} parent=35 // pred_check_branch
          %224 = sbr.rel (%p222) target = $region40
        $region39: #{tpu_custom_call.1} parent=35 // pred_region
          %225 = dma.done %s218, 128
        $region40: #{tpu_custom_call.1} parent=35 // pred_fallthru
          _
        %s226 = sand.u32 %s24, 1
        %s227 = scalar_lea.sflag [#allocation6], %s226
        %s228 = sand.u32 %s58, 1
        %s229 = smul.addr %s228, 8
        %s230 = scalar_lea.vmem [#allocation5], %s229
        // Predicated region
        $region41: #{tpu_custom_call.1} parent=35 // pred_check
          %p231 = pneg %p71
        $region42: #{tpu_custom_call.1} parent=35 // pred_check_branch
          %233 = sbr.rel (%p231) target = $region44
        $region43: #{tpu_custom_call.1} parent=35 // pred_region
          %234 = dma.done %s227, 128
        $region44: #{tpu_custom_call.1} parent=35 // pred_fallthru
          _
        // Predicated region
        $region45: #{tpu_custom_call.1} parent=35 // pred_check
          %p235 = pneg %p92
        $region46: #{tpu_custom_call.1} parent=35 // pred_check_branch
          %237 = sbr.rel (%p235) target = $region48
        $region47: #{tpu_custom_call.1} parent=35 // pred_region
          %238 = dma.done [#allocation6], 1024
        $region48: #{tpu_custom_call.1} parent=35 // pred_fallthru
          _
        %s239 = sand.u32 %s32, 1
        %s240 = scalar_lea.sflag [#allocation3], %s239
        %s241 = sand.u32 %s32, 1
        %s242 = smul.addr %s241, 8
        %s243 = scalar_lea.vmem [#allocation2], %s242
        %p244 = pneg %p45
        %p245 = pneg %p42
        %s246 = sand.u32 %s24, 1
        %s247 = scalar_lea.sflag [#allocation6], %s246
        %s248 = sand.u32 %s58, 1
        %s249 = smul.addr %s248, 8
        %s250 = scalar_lea.vmem [#allocation5], %s249
        %p251 = pneg %p71
        %p252 = pneg %p68
        %p253 = pneg %p92
        %p254 = pneg %p89
        %p255 = pneg %p113
        %p256 = pneg %p110
        %p257 = pneg %p139
        %p258 = pneg %p136
        %s259 = sand.u32 %s126, 1
        %s260 = scalar_lea.sflag [#allocation4], %s259
        %s261 = sand.u32 %s126, 1
        %s262 = smul.addr %s261, 8
        %s263 = scalar_lea.vmem [#allocation8], %s262
        %v264 = vld [vmem:[%s221] sm:$0xff]
        %v265 = vld [vmem:[%s230] sm:$0xff]
        %267 = vrot.lane.b32.xlu0 %v265, 32
        %v268 = vpop.permute.xlu0 %267
        %vm270 = vcmask 261120
        %v271 = vsel %vm270, %v264, %v268
        %v272 = vld [vmem:[#allocation7] sm:$0xff]
        %v273 = vld [vmem:[#allocation7 + $0x8] sm:$0xff]
        %v274 = vld [vmem:[#allocation7 + $0x10] sm:$0xff]
        %v275 = vld [vmem:[#allocation7 + $0x18] sm:$0xff]
        %v276 = vld [vmem:[#allocation7 + $0x20] sm:$0xff]
        %v277 = vld [vmem:[#allocation7 + $0x28] sm:$0xff]
        %v278 = vld [vmem:[#allocation7 + $0x30] sm:$0xff]
        %v279 = vld [vmem:[#allocation7 + $0x38] sm:$0xff]
        %v280 = vld [vmem:[%s3] sm:$0x1]
        %v282 = vlaneseq
        %v283 = vshrl.u32 %v282, 7
        %v284 = vsub.s32 0, %v283
        %v285 = vrot.slane %v280, %v284
        %vm287 = vcmask 523264
        %v289 = vsel %vm287, %v271, 0
        %291 = vmatprep.subr.mxu0 0.0
        %292 = vmatpush1.msra.mxu0 0.0
        %293 = vmatprep.subr.mxu0 0.0
        %294 = vmatpush1.msra.mxu0 0.0
        %295 = vmatprep.subr.mxu0 0.0
        %296 = vmatpush1.msra.mxu0 0.0
        %297 = vmatprep.subr.mxu0 0.0
        %298 = vmatpush1.msra.mxu0 0.0
        %299 = vmatprep.subr.mxu0 0.0
        %300 = vmatpush1.msra.mxu0 0.0
        %301 = vmatprep.subr.mxu0 0.0
        %302 = vmatpush1.msra.mxu0 0.0
        %303 = vmatprep.subr.mxu0 0.0
        %304 = vmatpush1.msra.mxu0 0.0
        %305 = vmatprep.subr.mxu0 0.0
        %306 = vmatpush1.msra.mxu0 0.0
        %307 = vmatprep.subr.mxu0 0.0
        %308 = vmatpush1.msra.mxu0 %v279
        %309 = vmatprep.subr.mxu0 0.0
        %310 = vmatpush1.msra.mxu0 %v278
        %311 = vmatprep.subr.mxu0 0.0
        %312 = vmatpush1.msra.mxu0 %v277
        %313 = vmatprep.subr.mxu0 0.0
        %314 = vmatpush1.msra.mxu0 %v276
        %315 = vmatprep.subr.mxu0 0.0
        %316 = vmatpush1.msra.mxu0 %v275
        %317 = vmatprep.subr.mxu0 0.0
        %318 = vmatpush1.msra.mxu0 %v274
        %319 = vmatprep.subr.mxu0 0.0
        %320 = vmatpush1.msra.mxu0 %v273
        %321 = vmatprep.subr.mxu0 0.0
        %322 = vmatpush1.msra.mxu0 %v272
        %323 = vmatprep.subr.mxu0 0.0
        %324 = vmatpush2.msra.mxu0 0.0
        %325 = vmatprep.subr.mxu0 0.0
        %326 = vmatpush2.msra.mxu0 0.0
        %327 = vmatprep.subr.mxu0 0.0
        %328 = vmatpush2.msra.mxu0 0.0
        %329 = vmatprep.subr.mxu0 0.0
        %330 = vmatpush2.msra.mxu0 0.0
        %331 = vmatprep.subr.mxu0 0.0
        %332 = vmatpush2.msra.mxu0 0.0
        %333 = vmatprep.subr.mxu0 0.0
        %334 = vmatpush2.msra.mxu0 0.0
        %335 = vmatprep.subr.mxu0 0.0
        %336 = vmatpush2.msra.mxu0 0.0
        %337 = vmatprep.subr.mxu0 0.0
        %338 = vmatpush2.msra.mxu0 0.0
        %339 = vmatprep.subr.mxu0 0.0
        %340 = vmatpush2.msra.mxu0 0.0
        %341 = vmatprep.subr.mxu0 0.0
        %342 = vmatpush2.msra.mxu0 0.0
        %343 = vmatprep.subr.mxu0 0.0
        %344 = vmatpush2.msra.mxu0 0.0
        %345 = vmatprep.subr.mxu0 0.0
        %346 = vmatpush2.msra.mxu0 0.0
        %347 = vmatprep.subr.mxu0 0.0
        %348 = vmatpush2.msra.mxu0 0.0
        %349 = vmatprep.subr.mxu0 0.0
        %350 = vmatpush2.msra.mxu0 0.0
        %351 = vmatprep.subr.mxu0 0.0
        %352 = vmatpush2.msra.mxu0 0.0
        %353 = vmatprep.subr.mxu0 0.0
        %354 = vmatpush2.msra.mxu0 0.0
        %355 = vmatprep.mubr.f32.mxu0 0.0
        %356 = vmatmul.mubr.f32.gmra.mxu0 %v289
        %v357 = vpop.f32.mrf.mxu0
        %v358 = vadd.f32 %v285, %v357
        %v359 = vpop.f32.mrf.mxu0
        %360 = vdwg.mxu0
        %v361 = vtanh.pop %v358
        %v362 = vxor.u32 %v358, 2147483648
        %v363 = vmul.f32 %v362, 1.442695
        %v364 = vpow.pop %v363
        %v365 = vadd.f32 %v364, 1.0
        %v366 = vrcp.pop %v365
        %v367 = vmul.f32 1.0, %v366
        %369 = vrot.lane.b32.xlu0 %v361, 32
        %v370 = vpop.permute.xlu0 %369
        %v372 = vmul.f32 %v367, %v370
        %v373 = vsub.f32 1.0, %v367
        %v374 = vmul.f32 %v373, 0.5
        %v375 = vadd.f32 %v264, %v265
        %377 = vrot.lane.b32.xlu0 %v375, 32
        %v378 = vpop.permute.xlu0 %377
        %v380 = vmul.f32 %v374, %v378
        %v381 = vadd.f32 %v372, %v380
        %383 = vrot.lane.b32.xlu0 %v381, 96
        %v384 = vpop.permute.xlu0 %383
        %386 = vst.msk [vmem:[%s263] sm:$0xff] %vm270, %v384
        %s387 = sand.u32 %s126, 1
        %s388 = scalar_lea.sflag [#allocation4], %s387
        %s389 = sand.u32 %s126, 1
        %s390 = smul.addr %s389, 8
        %s391 = scalar_lea.vmem [#allocation8], %s390
        // Predicated region
        $region49: #{tpu_custom_call.1} parent=35 // pred_check
          %p392 = pneg %p136
        $region50: #{tpu_custom_call.1} parent=35 // pred_check_branch
          %394 = sbr.rel (%p392) target = $region52
        $region51: #{tpu_custom_call.1} parent=35 // pred_region
          %s396 = ssub.s32 128, 128
          %397 = vsyncadd %s388, %s396
          %s398 = smul.addr %s24, 128
          %s399 = scalar_lea.hbm %s4, %s398
          %s401 = sshll.u32 %s391, 4
          %s402 = int_to_ptr.vmem [resolvable:$true] %s401
          %404 = dma.vmem_to_hbm [thread:$0]  %s402, 128, %s399, %s388
        $region52: #{tpu_custom_call.1} parent=35 // pred_fallthru
          _
      $region36: #{tpu_custom_call.1} parent=5 // pred_fallthru
        _
      %p405 = scmp.le.s32.totalorder 2, %s19
      // Predicated region
      $region53: #{tpu_custom_call.1} parent=5 // pred_check
        %p406 = pneg %p405
      $region54: #{tpu_custom_call.1} parent=5 // pred_check_branch
        %408 = sbr.rel (%p406) target = $region56
      $region55: #{tpu_custom_call.1} parent=5 // pred_region
        %s409 = ssub.s32 %s19, 2
        // Predicated region
        $region57: #{tpu_custom_call.1} parent=55 // pred_check
          %p410 = pneg %p142
        $region58: #{tpu_custom_call.1} parent=55 // pred_check_branch
          %412 = sbr.rel (%p410) target = $region60
        $region59: #{tpu_custom_call.1} parent=55 // pred_region
          %s413 = sand.u32 %s127, 1
          %s414 = scalar_lea.sflag [#allocation4], %s413
          %s415 = sand.u32 %s127, 1
          %s416 = smul.addr %s415, 8
          %s417 = scalar_lea.vmem [#allocation8], %s416
          %418 = dma.done %s414, 128
        $region60: #{tpu_custom_call.1} parent=55 // pred_fallthru
          _
      $region56: #{tpu_custom_call.1} parent=5 // pred_fallthru
        _
    $region6: #{tpu_custom_call.1} parent=1 // loop_footer
      %s23 = sadd.s32 1, %s19
    $region7: #{tpu_custom_call.1} parent=1 // loop_footer_branch
      %18 = sbr.rel target = $region3
    $region8: #{tpu_custom_call.1} parent=1 // loop_exit
      _
    %419 = vsyncpa [#allocation3], 1
    %s420 = scalar_lea.sflag [#allocation3], 1
    %421 = vsyncpa %s420, 1
    %422 = vsyncpa [#allocation6], 1
    %s423 = scalar_lea.sflag [#allocation6], 1
    %424 = vsyncpa %s423, 1
    %425 = vsyncpa [#allocation4], 1
    %s426 = scalar_lea.sflag [#allocation4], 1
    %427 = vsyncpa %s426, 1

</llo_original>
